<compile_context>
chip_gen: v7x
topology: tpu7x:2x2x1
jax: 0.10.0
libtpu: 0.0.40
codegen_flags: <defaults>
</compile_context>

<pallas_src>
import functools

import jax
import jax.numpy as jnp
from jax.experimental import pallas as pl
from jax.experimental.pallas import tpu as pltpu


# ----------------------------- parameter preparation (run once) -----------------------------

def _banded_weights(w, W):
    """w: (3, 3, Cin, Cout) HWIO -> (3, W*Cin, W*Cout) per-kh banded matrices.

    wb[kh, jw*Cin + ci, wo*Cout + co] = w[kh, jw - wo + 1, ci, co] when the kw tap
    jw - wo + 1 is in [0, 3), else 0 — i.e. a SAME-padded 1-D conv along W expressed as
    one dense matmul over the folded (W, Cin) lane axis.
    """
    KH, KW, Cin, Cout = w.shape
    jw = jnp.arange(W)[:, None]            # input column
    wo = jnp.arange(W)[None, :]            # output column
    tap = jw - wo + 1                      # (W, W)
    valid = (tap >= 0) & (tap < KW)
    wt = w[:, jnp.clip(tap, 0, KW - 1)]                        # (KH, W, W, Cin, Cout)
    wt = jnp.where(valid[None, :, :, None, None], wt, 0.0)
    return jnp.transpose(wt, (0, 1, 3, 2, 4)).reshape(KH, W * Cin, W * Cout)


def _folded_weights(w, W, P):
    """Banded (per-kh) -> block-diagonal over P lane-paired batch slots -> kh-stacked.

    Returns (3*P*W*Cin, P*W*Cout): rows ordered [kh=0 block | kh=1 block | kh=2 block],
    matching the kernel's [row-1 | row | row+1] lane-concatenated operand.
    """
    KH, KW, Cin, Cout = w.shape
    wb = _banded_weights(w, W)                                  # (KH, W*Cin, W*Cout)
    eye = jnp.eye(P, dtype=wb.dtype)
    bd = jnp.einsum("pq,krc->kprqc", eye, wb)                   # (KH, P, WCin, P, WCout)
    bd = bd.reshape(KH, P * W * Cin, P * W * Cout)
    return bd.reshape(KH * P * W * Cin, P * W * Cout)


def make_residual_block_params(w1, b1, w2, b2, *, W, P=2, mxu_dtype=jnp.bfloat16):
    """Precompute kernel operands ONCE (not per forward call).

    w1: (3,3,Cin,C1) HWIO, b1: (C1,), w2: (3,3,C1,Cin), b2: (Cin,).
    Returns (wf1, b1t, wf2, b2t) ready to feed to residual_block_pallas.
    """
    Cin, C1 = w1.shape[2], w1.shape[3]
    wf1 = _folded_weights(w1, W, P).astype(mxu_dtype)           # (3*P*W*Cin, P*W*C1)
    wf2 = _folded_weights(w2, W, P).astype(mxu_dtype)           # (3*P*W*C1, P*W*Cin)
    b1t = jnp.tile(b1, P * W).reshape(1, P * W * C1).astype(jnp.float32)
    b2t = jnp.tile(b2, P * W).reshape(1, P * W * Cin).astype(jnp.float32)
    return wf1, b1t, wf2, b2t


# ----------------------------------------- kernel -----------------------------------------

def _residual_block_kernel(x_ref, w1_ref, b1_ref, w2_ref, b2_ref, o_ref):
    # x_ref  : (G, H, P*W*Cin)   activations, caller dtype (exact residual path)
    # w1_ref : (3*P*W*Cin, P*W*C1)   kh-stacked block-diag banded conv1 weights (MXU dtype)
    # b1_ref : (1, P*W*C1) f32
    # w2_ref : (3*P*W*C1, P*W*Cin)
    # b2_ref : (1, P*W*Cin) f32
    # o_ref  : (G, H, P*W*Cin)   caller dtype
    G, H, PWC = x_ref.shape
    M = G * H
    mxu_dtype = w1_ref.dtype

    x = x_ref[...].reshape(M, PWC)              # free reshape (H multiple of sublane tile)
    xf = x.astype(jnp.float32)                  # exact skip-path copy / epilogue operand

    # Row masks: SAME zero-padding along H, respected per image even when G images are
    # stacked along the row (M) axis.
    row = jax.lax.broadcasted_iota(jnp.int32, (M, 1), 0) % H
    not_top = row != 0                          # row-1 neighbour exists inside the image
    not_bot = row != (H - 1)                    # row+1 neighbour exists inside the image

    def kh_folded_operand(a32):
        # a32: (M, K) f32 -> (M, 3K) MXU-dtype operand [row-1 | row | row+1].
        dn = jnp.where(not_top, pltpu.roll(a32, 1, 0), 0.0)       # a32[i-1], zero at top
        up = jnp.where(not_bot, pltpu.roll(a32, M - 1, 0), 0.0)   # a32[i+1], zero at bottom
        return jnp.concatenate([dn, a32, up], axis=-1).astype(mxu_dtype)

    # conv1 (3x3 SAME) + bias + ReLU : single MXU contraction, f32 accumulation.
    op1 = kh_folded_operand(xf)                                   # (M, 3*P*W*Cin)
    y1 = jnp.maximum(
        jnp.dot(op1, w1_ref[...], preferred_element_type=jnp.float32) + b1_ref[...],
        0.0)                                                      # (M, P*W*C1) f32

    # conv2 (3x3 SAME) : single MXU contraction.
    op2 = kh_folded_operand(y1)                                   # (M, 3*P*W*C1)
    acc2 = jnp.dot(op2, w2_ref[...], preferred_element_type=jnp.float32)

    # bias + exact-precision residual + ReLU, single lane-dense store in caller dtype.
    out = jnp.maximum(acc2 + b2_ref[...] + xf, 0.0)
    o_ref[...] = out.reshape(G, H, PWC).astype(o_ref.dtype)


# ----------------------------------------- wrapper -----------------------------------------

def _choose_rows_per_step(n_groups, H, target_rows=128):
    """Stack G groups' rows per grid step so M = G*H ≈ target_rows, but keep >=2 grid
    steps whenever there is more than one group (v7x: 2 TensorCores)."""
    target = max(1, target_rows // H)
    divs = [g for g in range(1, n_groups + 1) if n_groups % g == 0 and g <= target]
    pref = [g for g in divs if n_groups // g >= 2]
    return max(pref) if pref else max(divs)


@functools.partial(jax.jit, static_argnames=("P",))
def residual_block_pallas(x_nhwc, wf1, b1t, wf2, b2t, *, P=2):
    """x_nhwc: (B, H, W, Cin). Params from make_residual_block_params (same P)."""
    B, H, W, Cin = x_nhwc.shape
    assert B % P == 0, "batch must be divisible by the lane-pair factor P"
    # TODO(synk): pad the batch when B % P != 0 instead of asserting.
    nG = B // P
    PWC = P * W * Cin

    # Lane-pair P batches along the lane axis: (B,H,W,Cin) -> (nG, H, P*W*Cin).
    # Pure layout plumbing (tiny), so the kernel's loads/stores are 128-lane dense.
    xg = x_nhwc.reshape(nG, P, H, W * Cin).transpose(0, 2, 1, 3).reshape(nG, H, PWC)

    G = _choose_rows_per_step(nG, H)            # groups stacked into M per grid step
    grid = (nG // G,)

    grid_spec = pltpu.PrefetchScalarGridSpec(
        num_scalar_prefetch=0,
        grid=grid,
        in_specs=[
            pl.BlockSpec((G, H, PWC), lambda i: (i, 0, 0)),
            pl.BlockSpec(wf1.shape, lambda i: (0, 0)),   # grid-invariant
            pl.BlockSpec(b1t.shape, lambda i: (0, 0)),
            pl.BlockSpec(wf2.shape, lambda i: (0, 0)),
            pl.BlockSpec(b2t.shape, lambda i: (0, 0)),
        ],
        out_specs=pl.BlockSpec((G, H, PWC), lambda i: (i, 0, 0)),
    )

    out = pl.pallas_call(
        _residual_block_kernel,
        out_shape=jax.ShapeDtypeStruct((nG, H, PWC), x_nhwc.dtype),
        grid_spec=grid_spec,
        compiler_params=pltpu.CompilerParams(
            dimension_semantics=("parallel",),      # batch groups are independent
            vmem_limit_bytes=32 * 1024 * 1024,      # explicit budget, fits all chips
        ),
    )(xg, wf1, b1t, wf2, b2t)

    # Un-pair: (nG, H, P*W*Cin) -> (B, H, W, Cin).
    return out.reshape(nG, H, P, W, Cin).transpose(0, 2, 1, 3, 4).reshape(B, H, W, Cin)


# ---------------------------------------- reference ----------------------------------------

def residual_block_ref(x_nhwc, w1, b1, w2, b2):
    """Pure-JAX reference matching PyTorch ResidualBlock.forward (in NHWC)."""
    dn = ("NHWC", "HWIO", "NHWC")
    y = jax.lax.conv_general_dilated(x_nhwc, w1, (1, 1), "SAME",
                                     dimension_numbers=dn) + b1
    y = jnp.maximum(y, 0.0)
    f = jax.lax.conv_general_dilated(y, w2, (1, 1), "SAME",
                                     dimension_numbers=dn) + b2
    return jnp.maximum(f + x_nhwc, 0.0)


if __name__ == "__main__":
    B, Cin, C1, H, W = 2, 4, 8, 16, 16   # ResidualBlock(inp=4, out1=8)
    P = 2                                 # lane-pair both batches -> 128-lane slabs

    key = jax.random.PRNGKey(0)
    kx, kw1, kb1, kw2, kb2 = jax.random.split(key, 5)

    # Input in PyTorch's NCHW convention, converted to the kernel's NHWC layout.
    x_nchw = jax.random.normal(kx, (B, Cin, H, W), dtype=jnp.float32)
    x_nhwc = jnp.transpose(x_nchw, (0, 2, 3, 1))

    # Deterministic synthetic parameters (HWIO layout for the kernel).
    w1 = jax.random.normal(kw1, (3, 3, Cin, C1), dtype=jnp.float32) * 0.1
    b1 = jax.random.normal(kb1, (C1,), dtype=jnp.float32) * 0.1
    w2 = jax.random.normal(kw2, (3, 3, C1, Cin), dtype=jnp.float32) * 0.1
    b2 = jax.random.normal(kb2, (Cin,), dtype=jnp.float32) * 0.1

    ref = residual_block_ref(x_nhwc, w1, b1, w2, b2)

    # Strict check of the folded-matmul formulation (f32 MXU operands).
    params_f32 = make_residual_block_params(w1, b1, w2, b2, W=W, P=P,
                                            mxu_dtype=jnp.float32)
    out_f32 = jax.block_until_ready(residual_block_pallas(x_nhwc, *params_f32, P=P))
    assert out_f32.shape == (B, H, W, Cin)
    err_f32 = float(jnp.max(jnp.abs(out_f32 - ref)))
    assert err_f32 < 2e-3, f"f32 path max abs err = {err_f32}"

    # Default fast path: bf16 MXU operands, f32 accumulation, exact f32 residual add.
    params = make_residual_block_params(w1, b1, w2, b2, W=W, P=P,
                                        mxu_dtype=jnp.bfloat16)
    out = jax.block_until_ready(residual_block_pallas(x_nhwc, *params, P=P))
    assert out.shape == (B, H, W, Cin)
    err_bf16 = float(jnp.max(jnp.abs(out - ref)))
    assert err_bf16 < 5e-2, f"bf16 path max abs err = {err_bf16}"

    print("KERNEL_OK")
</pallas_src>

<mosaic_0001>
module attributes {stable_mosaic.version = 11 : i64} {
  func.func @_residual_block_kernel(%arg0: i32, %arg1: memref<1x16x128xf32, #tpu.memory_space<vmem>>, %arg2: memref<384x256xf32, #tpu.memory_space<vmem>>, %arg3: memref<1x256xf32, #tpu.memory_space<vmem>>, %arg4: memref<768x128xf32, #tpu.memory_space<vmem>>, %arg5: memref<1x128xf32, #tpu.memory_space<vmem>>, %arg6: memref<1x16x128xf32, #tpu.memory_space<vmem>>) attributes {dimension_semantics = [#tpu.dimension_semantics<parallel>], iteration_bounds = array<i64: 1>, scalar_prefetch = 0 : i64, scratch_operands = 0 : i64, tpu.core_type = #tpu.core_type<tc>, window_params = [{transform_indices = @transform_0, window_bounds = array<i64: 1, 16, 128>}, {pipeline_mode = #tpu.pipeline_mode<synchronous>, transform_indices = @transform_1, window_bounds = array<i64: 384, 256>}, {pipeline_mode = #tpu.pipeline_mode<synchronous>, transform_indices = @transform_2, window_bounds = array<i64: 1, 256>}, {pipeline_mode = #tpu.pipeline_mode<synchronous>, transform_indices = @transform_3, window_bounds = array<i64: 768, 128>}, {pipeline_mode = #tpu.pipeline_mode<synchronous>, transform_indices = @transform_4, window_bounds = array<i64: 1, 128>}, {transform_indices = @transform_5, window_bounds = array<i64: 1, 16, 128>}]} {
    %c0 = arith.constant 0 : index
    %c0_0 = arith.constant 0 : index
    %c0_1 = arith.constant 0 : index
    %0 = vector.load %arg1[%c0, %c0_0, %c0_1] : memref<1x16x128xf32, #tpu.memory_space<vmem>>, vector<1x16x128xf32>
    %1 = vector.shape_cast %0 : vector<1x16x128xf32> to vector<16x128xf32>
    %2 = tpu.iota {dimensions = array<i32: 0>} : vector<16x1xi32>
    %c16_i32 = arith.constant 16 : i32
    %c0_i32 = arith.constant 0 : i32
    %3 = arith.cmpi eq, %c16_i32, %c0_i32 : i32
    %c1_i32 = arith.constant 1 : i32
    %4 = arith.select %3, %c1_i32, %c16_i32 : i32
    %5 = vector.broadcast %4 : i32 to vector<16x1xi32>
    %6 = arith.remsi %2, %5 : vector<16x1xi32>
    %c0_i32_2 = arith.constant 0 : i32
    %7 = vector.broadcast %c0_i32_2 : i32 to vector<16x1xi32>
    %8 = arith.cmpi ne, %6, %7 : vector<16x1xi32>
    %c0_i32_3 = arith.constant 0 : i32
    %9 = vector.broadcast %c0_i32_3 : i32 to vector<16x1xi32>
    %10 = arith.cmpi slt, %6, %9 : vector<16x1xi32>
    %c0_i32_4 = arith.constant 0 : i32
    %11 = arith.cmpi slt, %4, %c0_i32_4 : i32
    %12 = vector.broadcast %11 : i1 to vector<16x1xi1>
    %13 = vector.broadcast %12 : vector<16x1xi1> to vector<16x1xi1>
    %14 = arith.xori %10, %13 : vector<16x1xi1>
    %15 = arith.andi %14, %8 : vector<16x1xi1>
    %16 = vector.broadcast %4 : i32 to vector<16x1xi32>
    %17 = arith.addi %6, %16 : vector<16x1xi32>
    %18 = arith.select %15, %17, %6 : vector<16x1xi1>, vector<16x1xi32>
    %c0_i32_5 = arith.constant 0 : i32
    %19 = vector.broadcast %c0_i32_5 : i32 to vector<16x1xi32>
    %20 = arith.cmpi ne, %18, %19 : vector<16x1xi32>
    %c15_i32 = arith.constant 15 : i32
    %21 = vector.broadcast %c15_i32 : i32 to vector<16x1xi32>
    %22 = arith.cmpi ne, %18, %21 : vector<16x1xi32>
    %c1_i32_6 = arith.constant 1 : i32
    %23 = tpu.dynamic_rotate %1 by %c1_i32_6 dim 0 : vector<16x128xf32>, i32 -> vector<16x128xf32>
    %cst = arith.constant 0.000000e+00 : f32
    %24 = vector.shape_cast %20 : vector<16x1xi1> to vector<16x1xi1>
    %25 = vector.broadcast %24 : vector<16x1xi1> to vector<16x128xi1>
    %26 = vector.broadcast %cst : f32 to vector<16x128xf32>
    %27 = arith.select %25, %23, %26 : vector<16x128xi1>, vector<16x128xf32>
    %c15_i32_7 = arith.constant 15 : i32
    %28 = tpu.dynamic_rotate %1 by %c15_i32_7 dim 0 : vector<16x128xf32>, i32 -> vector<16x128xf32>
    %cst_8 = arith.constant 0.000000e+00 : f32
    %29 = vector.shape_cast %22 : vector<16x1xi1> to vector<16x1xi1>
    %30 = vector.broadcast %29 : vector<16x1xi1> to vector<16x128xi1>
    %31 = vector.broadcast %cst_8 : f32 to vector<16x128xf32>
    %32 = arith.select %30, %28, %31 : vector<16x128xi1>, vector<16x128xf32>
    %33 = tpu.concatenate %27, %1, %32 in 1 : vector<16x128xf32>, vector<16x128xf32>, vector<16x128xf32> -> vector<16x384xf32>
    %c0_9 = arith.constant 0 : index
    %c0_10 = arith.constant 0 : index
    %34 = vector.load %arg2[%c0_9, %c0_10] : memref<384x256xf32, #tpu.memory_space<vmem>>, vector<384x256xf32>
    %cst_11 = arith.constant dense<0.000000e+00> : vector<16x256xf32>
    %35 = tpu.matmul %33, %34, %cst_11 {dimension_numbers = #tpu.dot_dimension_numbers<[1], [0], [0], [1], [0, 0, 1, 1], [], []>} : vector<16x384xf32>, vector<384x256xf32>, vector<16x256xf32> -> vector<16x256xf32>
    %c0_12 = arith.constant 0 : index
    %c0_13 = arith.constant 0 : index
    %36 = vector.load %arg3[%c0_12, %c0_13] : memref<1x256xf32, #tpu.memory_space<vmem>>, vector<1x256xf32>
    %37 = vector.broadcast %36 : vector<1x256xf32> to vector<16x256xf32>
    %38 = arith.addf %35, %37 : vector<16x256xf32>
    %cst_14 = arith.constant 0.000000e+00 : f32
    %39 = vector.broadcast %cst_14 : f32 to vector<16x256xf32>
    %40 = arith.maximumf %38, %39 : vector<16x256xf32>
    %c1_i32_15 = arith.constant 1 : i32
    %41 = tpu.dynamic_rotate %40 by %c1_i32_15 dim 0 : vector<16x256xf32>, i32 -> vector<16x256xf32>
    %cst_16 = arith.constant 0.000000e+00 : f32
    %42 = vector.shape_cast %20 : vector<16x1xi1> to vector<16x1xi1>
    %43 = vector.broadcast %42 : vector<16x1xi1> to vector<16x256xi1>
    %44 = vector.broadcast %cst_16 : f32 to vector<16x256xf32>
    %45 = arith.select %43, %41, %44 : vector<16x256xi1>, vector<16x256xf32>
    %c15_i32_17 = arith.constant 15 : i32
    %46 = tpu.dynamic_rotate %40 by %c15_i32_17 dim 0 : vector<16x256xf32>, i32 -> vector<16x256xf32>
    %cst_18 = arith.constant 0.000000e+00 : f32
    %47 = vector.shape_cast %22 : vector<16x1xi1> to vector<16x1xi1>
    %48 = vector.broadcast %47 : vector<16x1xi1> to vector<16x256xi1>
    %49 = vector.broadcast %cst_18 : f32 to vector<16x256xf32>
    %50 = arith.select %48, %46, %49 : vector<16x256xi1>, vector<16x256xf32>
    %51 = tpu.concatenate %45, %40, %50 in 1 : vector<16x256xf32>, vector<16x256xf32>, vector<16x256xf32> -> vector<16x768xf32>
    %c0_19 = arith.constant 0 : index
    %c0_20 = arith.constant 0 : index
    %52 = vector.load %arg4[%c0_19, %c0_20] : memref<768x128xf32, #tpu.memory_space<vmem>>, vector<768x128xf32>
    %cst_21 = arith.constant dense<0.000000e+00> : vector<16x128xf32>
    %53 = tpu.matmul %51, %52, %cst_21 {dimension_numbers = #tpu.dot_dimension_numbers<[1], [0], [0], [1], [0, 0, 1, 1], [], []>} : vector<16x768xf32>, vector<768x128xf32>, vector<16x128xf32> -> vector<16x128xf32>
    %c0_22 = arith.constant 0 : index
    %c0_23 = arith.constant 0 : index
    %54 = vector.load %arg5[%c0_22, %c0_23] : memref<1x128xf32, #tpu.memory_space<vmem>>, vector<1x128xf32>
    %55 = vector.broadcast %54 : vector<1x128xf32> to vector<16x128xf32>
    %56 = arith.addf %53, %55 : vector<16x128xf32>
    %57 = arith.addf %56, %1 : vector<16x128xf32>
    %cst_24 = arith.constant 0.000000e+00 : f32
    %58 = vector.broadcast %cst_24 : f32 to vector<16x128xf32>
    %59 = arith.maximumf %57, %58 : vector<16x128xf32>
    %60 = vector.shape_cast %59 : vector<16x128xf32> to vector<1x16x128xf32>
    %c0_25 = arith.constant 0 : index
    %c0_26 = arith.constant 0 : index
    %c0_27 = arith.constant 0 : index
    %61 = vector.load %arg6[%c0_25, %c0_26, %c0_27] : memref<1x16x128xf32, #tpu.memory_space<vmem>>, vector<1x16x128xf32>
    tpu.vector_store %arg6[%c0_25, %c0_26, %c0_27], %60 {strides = array<i32>} : memref<1x16x128xf32, #tpu.memory_space<vmem>>, vector<1x16x128xf32>,
    return
  }
  func.func @transform_0(%arg0: i32) -> (i32, i32, i32) {
    %c0_i32 = arith.constant 0 : i32
    %c0_i32_0 = arith.constant 0 : i32
    %c0_i32_1 = arith.constant 0 : i32
    return %arg0, %c0_i32, %c0_i32_0 : i32, i32, i32
  }
  func.func @transform_1(%arg0: i32) -> (i32, i32) {
    %c0_i32 = arith.constant 0 : i32
    %c0_i32_0 = arith.constant 0 : i32
    %c0_i32_1 = arith.constant 0 : i32
    return %c0_i32, %c0_i32_0 : i32, i32
  }
  func.func @transform_2(%arg0: i32) -> (i32, i32) {
    %c0_i32 = arith.constant 0 : i32
    %c0_i32_0 = arith.constant 0 : i32
    %c0_i32_1 = arith.constant 0 : i32
    return %c0_i32, %c0_i32_0 : i32, i32
  }
  func.func @transform_3(%arg0: i32) -> (i32, i32) {
    %c0_i32 = arith.constant 0 : i32
    %c0_i32_0 = arith.constant 0 : i32
    %c0_i32_1 = arith.constant 0 : i32
    return %c0_i32, %c0_i32_0 : i32, i32
  }
  func.func @transform_4(%arg0: i32) -> (i32, i32) {
    %c0_i32 = arith.constant 0 : i32
    %c0_i32_0 = arith.constant 0 : i32
    %c0_i32_1 = arith.constant 0 : i32
    return %c0_i32, %c0_i32_0 : i32, i32
  }
  func.func @transform_5(%arg0: i32) -> (i32, i32, i32) {
    %c0_i32 = arith.constant 0 : i32
    %c0_i32_0 = arith.constant 0 : i32
    %c0_i32_1 = arith.constant 0 : i32
    return %arg0, %c0_i32, %c0_i32_0 : i32, i32, i32
  }
}

</mosaic_0001>

<llo_original>
// kernel: residual_block_pallas.1
$region0: #{residual_block_pallas.1}
  #allocation0 [shape = 'u32[]', space=smem, size = 0x4, offset = 0x4, fixed_abs, tag = 'smem constant byte address 0x4 - core index']
  #allocation1 [shape = 'u32[144,128]{1,0:T(1,128)}', space=vmem, size = 0x12000, scoped, tag = 'internal scratch']
  %s0 = inlined_call_operand.vmem [shape: f32[1,16,128], index: 0, kind: input, shape index: {}]
  %s1 = inlined_call_operand.hbm [shape: f32[384,256], index: 1, kind: input, shape index: {}]
  %s2 = inlined_call_operand.vmem [shape: f32[1,256], index: 2, kind: input, shape index: {}]
  %s3 = inlined_call_operand.hbm [shape: f32[768,128], index: 3, kind: input, shape index: {}]
  %s4 = inlined_call_operand.vmem [shape: f32[1,128], index: 4, kind: input, shape index: {}]
  %s5 = inlined_call_operand.vmem [shape: f32[1,16,128], index: 5, kind: output, shape index: {}]
  %s6 = sld [smem:[#allocation0]]
  $region38: #{residual_block_pallas.1} parent=0
    _
  %s8 = ssub.s32 1, %s6
  %s9 = scalar_select 0, %s8, %s6
  $region1: #{residual_block_pallas.1} parent=0
    #allocation2 [shape = 'u8[393216]{0}', space=vmem, size = 0x60000, scoped, tag = 'input window, operand 1, single buffered']
    #allocation3 [shape = 's32[1]{0}', space=sflag, size = 0x4, scoped, tag = 'scoped memory for residual_block_pallas.1']
    #allocation4 [shape = 'u8[393216]{0}', space=vmem, size = 0x60000, scoped, tag = 'input window, operand 3, single buffered']
    #allocation5 [shape = 's32[1]{0}', space=sflag, size = 0x4, scoped, tag = 'scoped memory for residual_block_pallas.1']
    %10 = vsyncpa [#allocation3], 0
    %11 = vsyncpa [#allocation5], 0
    // Predicated region
    $region2: #{residual_block_pallas.1} parent=1 // pred_check
      _
    $region3: #{residual_block_pallas.1} parent=1 // pred_check_branch
      %13 = sbr.rel (0) target = $region5
    $region4: #{residual_block_pallas.1} parent=1 // pred_region
      _
    $region5: #{residual_block_pallas.1} parent=1 // pred_fallthru
      _
    // Predicated region
    $region6: #{residual_block_pallas.1} parent=1 // pred_check
      _
    $region7: #{residual_block_pallas.1} parent=1 // pred_check_branch
      %15 = sbr.rel (0) target = $region9
    $region8: #{residual_block_pallas.1} parent=1 // pred_region
      %s17 = ssub.s32 12288, 12288
      %18 = vsyncadd [#allocation3], %s17
      %s19 = sshll.u32 [#allocation2], 4
      %s20 = int_to_ptr.vmem [resolvable:$true] %s19
      %25 = dma.hbm_to_vmem [thread:$0]  %s1, 12288, %s20, [#allocation3], 256, 256, 16
    $region9: #{residual_block_pallas.1} parent=1 // pred_fallthru
      _
    // Predicated region
    $region10: #{residual_block_pallas.1} parent=1 // pred_check
      _
    $region11: #{residual_block_pallas.1} parent=1 // pred_check_branch
      %27 = sbr.rel (0) target = $region13
    $region12: #{residual_block_pallas.1} parent=1 // pred_region
      _
    $region13: #{residual_block_pallas.1} parent=1 // pred_fallthru
      _
    // Predicated region
    $region14: #{residual_block_pallas.1} parent=1 // pred_check
      _
    $region15: #{residual_block_pallas.1} parent=1 // pred_check_branch
      %29 = sbr.rel (0) target = $region17
    $region16: #{residual_block_pallas.1} parent=1 // pred_region
      %s31 = ssub.s32 12288, 12288
      %32 = vsyncadd [#allocation5], %s31
      %s33 = sshll.u32 [#allocation4], 4
      %s34 = int_to_ptr.vmem [resolvable:$true] %s33
      %39 = dma.hbm_to_vmem [thread:$0]  %s3, 12288, %s34, [#allocation5], 128, 128, 8
    $region17: #{residual_block_pallas.1} parent=1 // pred_fallthru
      _
    // Predicated region
    $region18: #{residual_block_pallas.1} parent=1 // pred_check
      _
    $region19: #{residual_block_pallas.1} parent=1 // pred_check_branch
      %41 = sbr.rel (0) target = $region21
    $region20: #{residual_block_pallas.1} parent=1 // pred_region
      _
    $region21: #{residual_block_pallas.1} parent=1 // pred_fallthru
      _
    // Predicated region
    $region22: #{residual_block_pallas.1} parent=1 // pred_check
      _
    $region23: #{residual_block_pallas.1} parent=1 // pred_check_branch
      %43 = sbr.rel (0) target = $region25
    $region24: #{residual_block_pallas.1} parent=1 // pred_region
      %44 = dma.done [#allocation3], 12288
    $region25: #{residual_block_pallas.1} parent=1 // pred_fallthru
      _
    // Predicated region
    $region26: #{residual_block_pallas.1} parent=1 // pred_check
      _
    $region27: #{residual_block_pallas.1} parent=1 // pred_check_branch
      %46 = sbr.rel (0) target = $region29
    $region28: #{residual_block_pallas.1} parent=1 // pred_region
      %47 = dma.done [#allocation5], 12288
    $region29: #{residual_block_pallas.1} parent=1 // pred_fallthru
      _
    %v48 = vld [vmem:[%s0] sm:$0xff]
    %v49 = vld [vmem:[%s0 + $0x8] sm:$0xff]
    %v50 = vlaneseq
    %v51 = vshrl.u32 %v50, 7
    %v52 = vadd.s32 %v51, 8
    %vm53 = vcmp.lt.s32.totalorder %v51, 0
    %v54 = vsub.s32 0, %v51
    %v55 = vsel %vm53, %v54, %v51
    %v56 = vshrl.u32 %v55, 4
    %v57 = vand.u32 %v55, 15
    %v58 = vsub.s32 0, %v57
    %v59 = vsel %vm53, %v58, %v57
    %vm60 = vcmp.lt.s32.totalorder %v52, 0
    %v61 = vsub.s32 0, %v52
    %v62 = vsel %vm60, %v61, %v52
    %v63 = vshrl.u32 %v62, 4
    %v64 = vand.u32 %v62, 15
    %v65 = vsub.s32 0, %v64
    %v66 = vsel %vm60, %v65, %v64
    %vm67 = vcmp.ne.s32.totalorder %v59, 0
    %vm68 = vcmp.ne.s32.totalorder %v66, 0
    %vm69 = vcmp.lt.s32.totalorder %v59, 0
    %vm70 = vcmp.lt.s32.totalorder %v66, 0
    %vm71 = vmand %vm69, %vm67
    %vm72 = vmand %vm70, %vm68
    %v73 = vadd.s32 %v59, 16
    %v74 = vadd.s32 %v66, 16
    %v75 = vsel %vm71, %v73, %v59
    %v76 = vsel %vm72, %v74, %v66
    %vm77 = vcmp.ne.s32.totalorder %v75, 0
    %vm78 = vcmp.ne.s32.totalorder %v76, 0
    %vm79 = vcmp.ne.s32.totalorder %v75, 15
    %vm80 = vcmp.ne.s32.totalorder %v76, 15
    %v81 = vrot.slane %v48, 7
    %v82 = vrot.slane %v49, 7
    %vm83 = vcmp.lt.s32.totalorder %v51, 1
    %v84 = vsel %vm83, %v81, %v82
    %v85 = vsel %vm83, %v82, %v81
    %v86 = vsel %vm77, 1, 0
    %v87 = vsel %vm78, 1, 0
    %vm88 = vcmp.eq.s32.totalorder %v86, 1
    %vm89 = vcmp.eq.s32.totalorder %v87, 1
    %v90 = vsel %vm88, %v85, 0.0
    %v91 = vsel %vm89, %v84, 0.0
    %v92 = vrot.slane %v48, 1
    %v93 = vrot.slane %v49, 1
    %vm94 = vcmp.lt.s32.totalorder %v51, 7
    %v95 = vsel %vm94, %v92, %v93
    %v96 = vsel %vm94, %v93, %v92
    %v97 = vsel %vm79, 1, 0
    %v98 = vsel %vm80, 1, 0
    %vm99 = vcmp.eq.s32.totalorder %v97, 1
    %vm100 = vcmp.eq.s32.totalorder %v98, 1
    %v101 = vsel %vm99, %v95, 0.0
    %v102 = vsel %vm100, %v96, 0.0
    %v103 = vld [vmem:[#allocation2] sm:$0xff]
    %v104 = vld [vmem:[#allocation2 + $0x8] sm:$0xff]
    %v105 = vld [vmem:[#allocation2 + $0x10] sm:$0xff]
    %v106 = vld [vmem:[#allocation2 + $0x18] sm:$0xff]
    %v107 = vld [vmem:[#allocation2 + $0x20] sm:$0xff]
    %v108 = vld [vmem:[#allocation2 + $0x28] sm:$0xff]
    %v109 = vld [vmem:[#allocation2 + $0x30] sm:$0xff]
    %v110 = vld [vmem:[#allocation2 + $0x38] sm:$0xff]
    %v111 = vld [vmem:[#allocation2 + $0x40] sm:$0xff]
    %v112 = vld [vmem:[#allocation2 + $0x48] sm:$0xff]
    %v113 = vld [vmem:[#allocation2 + $0x50] sm:$0xff]
    %v114 = vld [vmem:[#allocation2 + $0x58] sm:$0xff]
    %v115 = vld [vmem:[#allocation2 + $0x60] sm:$0xff]
    %v116 = vld [vmem:[#allocation2 + $0x68] sm:$0xff]
    %v117 = vld [vmem:[#allocation2 + $0x70] sm:$0xff]
    %v118 = vld [vmem:[#allocation2 + $0x78] sm:$0xff]
    %v119 = vld [vmem:[#allocation2 + $0x80] sm:$0xff]
    %v120 = vld [vmem:[#allocation2 + $0x88] sm:$0xff]
    %v121 = vld [vmem:[#allocation2 + $0x90] sm:$0xff]
    %v122 = vld [vmem:[#allocation2 + $0x98] sm:$0xff]
    %v123 = vld [vmem:[#allocation2 + $0xa0] sm:$0xff]
    %v124 = vld [vmem:[#allocation2 + $0xa8] sm:$0xff]
    %v125 = vld [vmem:[#allocation2 + $0xb0] sm:$0xff]
    %v126 = vld [vmem:[#allocation2 + $0xb8] sm:$0xff]
    %v127 = vld [vmem:[#allocation2 + $0xc0] sm:$0xff]
    %v128 = vld [vmem:[#allocation2 + $0xc8] sm:$0xff]
    %v129 = vld [vmem:[#allocation2 + $0xd0] sm:$0xff]
    %v130 = vld [vmem:[#allocation2 + $0xd8] sm:$0xff]
    %v131 = vld [vmem:[#allocation2 + $0xe0] sm:$0xff]
    %v132 = vld [vmem:[#allocation2 + $0xe8] sm:$0xff]
    %v133 = vld [vmem:[#allocation2 + $0xf0] sm:$0xff]
    %v134 = vld [vmem:[#allocation2 + $0xf8] sm:$0xff]
    %v135 = vld [vmem:[#allocation2 + $0x100] sm:$0xff]
    %v136 = vld [vmem:[#allocation2 + $0x108] sm:$0xff]
    %v137 = vld [vmem:[#allocation2 + $0x110] sm:$0xff]
    %v138 = vld [vmem:[#allocation2 + $0x118] sm:$0xff]
    %v139 = vld [vmem:[#allocation2 + $0x120] sm:$0xff]
    %v140 = vld [vmem:[#allocation2 + $0x128] sm:$0xff]
    %v141 = vld [vmem:[#allocation2 + $0x130] sm:$0xff]
    %v142 = vld [vmem:[#allocation2 + $0x138] sm:$0xff]
    %v143 = vld [vmem:[#allocation2 + $0x140] sm:$0xff]
    %v144 = vld [vmem:[#allocation2 + $0x148] sm:$0xff]
    %v145 = vld [vmem:[#allocation2 + $0x150] sm:$0xff]
    %v146 = vld [vmem:[#allocation2 + $0x158] sm:$0xff]
    %v147 = vld [vmem:[#allocation2 + $0x160] sm:$0xff]
    %v148 = vld [vmem:[#allocation2 + $0x168] sm:$0xff]
    %v149 = vld [vmem:[#allocation2 + $0x170] sm:$0xff]
    %v150 = vld [vmem:[#allocation2 + $0x178] sm:$0xff]
    %v151 = vld [vmem:[#allocation2 + $0x180] sm:$0xff]
    %v152 = vld [vmem:[#allocation2 + $0x188] sm:$0xff]
    %v153 = vld [vmem:[#allocation2 + $0x190] sm:$0xff]
    %v154 = vld [vmem:[#allocation2 + $0x198] sm:$0xff]
    %v155 = vld [vmem:[#allocation2 + $0x1a0] sm:$0xff]
    %v156 = vld [vmem:[#allocation2 + $0x1a8] sm:$0xff]
    %v157 = vld [vmem:[#allocation2 + $0x1b0] sm:$0xff]
    %v158 = vld [vmem:[#allocation2 + $0x1b8] sm:$0xff]
    %v159 = vld [vmem:[#allocation2 + $0x1c0] sm:$0xff]
    %v160 = vld [vmem:[#allocation2 + $0x1c8] sm:$0xff]
    %v161 = vld [vmem:[#allocation2 + $0x1d0] sm:$0xff]
    %v162 = vld [vmem:[#allocation2 + $0x1d8] sm:$0xff]
    %v163 = vld [vmem:[#allocation2 + $0x1e0] sm:$0xff]
    %v164 = vld [vmem:[#allocation2 + $0x1e8] sm:$0xff]
    %v165 = vld [vmem:[#allocation2 + $0x1f0] sm:$0xff]
    %v166 = vld [vmem:[#allocation2 + $0x1f8] sm:$0xff]
    %v167 = vld [vmem:[#allocation2 + $0x200] sm:$0xff]
    %v168 = vld [vmem:[#allocation2 + $0x208] sm:$0xff]
    %v169 = vld [vmem:[#allocation2 + $0x210] sm:$0xff]
    %v170 = vld [vmem:[#allocation2 + $0x218] sm:$0xff]
    %v171 = vld [vmem:[#allocation2 + $0x220] sm:$0xff]
    %v172 = vld [vmem:[#allocation2 + $0x228] sm:$0xff]
    %v173 = vld [vmem:[#allocation2 + $0x230] sm:$0xff]
    %v174 = vld [vmem:[#allocation2 + $0x238] sm:$0xff]
    %v175 = vld [vmem:[#allocation2 + $0x240] sm:$0xff]
    %v176 = vld [vmem:[#allocation2 + $0x248] sm:$0xff]
    %v177 = vld [vmem:[#allocation2 + $0x250] sm:$0xff]
    %v178 = vld [vmem:[#allocation2 + $0x258] sm:$0xff]
    %v179 = vld [vmem:[#allocation2 + $0x260] sm:$0xff]
    %v180 = vld [vmem:[#allocation2 + $0x268] sm:$0xff]
    %v181 = vld [vmem:[#allocation2 + $0x270] sm:$0xff]
    %v182 = vld [vmem:[#allocation2 + $0x278] sm:$0xff]
    %v183 = vld [vmem:[#allocation2 + $0x280] sm:$0xff]
    %v184 = vld [vmem:[#allocation2 + $0x288] sm:$0xff]
    %v185 = vld [vmem:[#allocation2 + $0x290] sm:$0xff]
    %v186 = vld [vmem:[#allocation2 + $0x298] sm:$0xff]
    %v187 = vld [vmem:[#allocation2 + $0x2a0] sm:$0xff]
    %v188 = vld [vmem:[#allocation2 + $0x2a8] sm:$0xff]
    %v189 = vld [vmem:[#allocation2 + $0x2b0] sm:$0xff]
    %v190 = vld [vmem:[#allocation2 + $0x2b8] sm:$0xff]
    %v191 = vld [vmem:[#allocation2 + $0x2c0] sm:$0xff]
    %v192 = vld [vmem:[#allocation2 + $0x2c8] sm:$0xff]
    %v193 = vld [vmem:[#allocation2 + $0x2d0] sm:$0xff]
    %v194 = vld [vmem:[#allocation2 + $0x2d8] sm:$0xff]
    %v195 = vld [vmem:[#allocation2 + $0x2e0] sm:$0xff]
    %v196 = vld [vmem:[#allocation2 + $0x2e8] sm:$0xff]
    %v197 = vld [vmem:[#allocation2 + $0x2f0] sm:$0xff]
    %v198 = vld [vmem:[#allocation2 + $0x2f8] sm:$0xff]
    %v199 = vld [vmem:[%s2] sm:$0x3]
    %v201 = vlaneseq
    %v202 = vshrl.u32 %v201, 7
    %v203 = vsub.s32 0, %v202
    %v204 = vrot.slane %v199, %v203
    %v205 = vlaneseq
    %v206 = vshrl.u32 %v205, 7
    %v207 = vsub.s32 1, %v206
    %v208 = vrot.slane %v199, %v207
    %211 = vmatprep.subr.mxu0 %v104
    %212 = vmatpush1.msra.mxu0 %v103
    %213 = vmatprep.subr.mxu0 %v106
    %214 = vmatpush1.msra.mxu0 %v105
    %215 = vmatprep.subr.mxu0 %v108
    %216 = vmatpush1.msra.mxu0 %v107
    %217 = vmatprep.subr.mxu0 %v110
    %218 = vmatpush1.msra.mxu0 %v109
    %219 = vmatprep.subr.mxu0 %v112
    %220 = vmatpush1.msra.mxu0 %v111
    %221 = vmatprep.subr.mxu0 %v114
    %222 = vmatpush1.msra.mxu0 %v113
    %223 = vmatprep.subr.mxu0 %v116
    %224 = vmatpush1.msra.mxu0 %v115
    %225 = vmatprep.subr.mxu0 %v118
    %226 = vmatpush1.msra.mxu0 %v117
    %227 = vmatprep.subr.mxu0 %v120
    %228 = vmatpush1.msra.mxu0 %v119
    %229 = vmatprep.subr.mxu0 %v122
    %230 = vmatpush1.msra.mxu0 %v121
    %231 = vmatprep.subr.mxu0 %v124
    %232 = vmatpush1.msra.mxu0 %v123
    %233 = vmatprep.subr.mxu0 %v126
    %234 = vmatpush1.msra.mxu0 %v125
    %235 = vmatprep.subr.mxu0 %v128
    %236 = vmatpush1.msra.mxu0 %v127
    %237 = vmatprep.subr.mxu0 %v130
    %238 = vmatpush1.msra.mxu0 %v129
    %239 = vmatprep.subr.mxu0 %v132
    %240 = vmatpush1.msra.mxu0 %v131
    %241 = vmatprep.subr.mxu0 %v134
    %242 = vmatpush1.msra.mxu0 %v133
    %243 = vmatprep.subr.mxu0 %v136
    %244 = vmatpush1.msra.mxu0 %v135
    %245 = vmatprep.subr.mxu0 %v138
    %246 = vmatpush1.msra.mxu0 %v137
    %247 = vmatprep.subr.mxu0 %v140
    %248 = vmatpush1.msra.mxu0 %v139
    %249 = vmatprep.subr.mxu0 %v142
    %250 = vmatpush1.msra.mxu0 %v141
    %251 = vmatprep.subr.mxu0 %v144
    %252 = vmatpush1.msra.mxu0 %v143
    %253 = vmatprep.subr.mxu0 %v146
    %254 = vmatpush1.msra.mxu0 %v145
    %255 = vmatprep.subr.mxu0 %v148
    %256 = vmatpush1.msra.mxu0 %v147
    %257 = vmatprep.subr.mxu0 %v150
    %258 = vmatpush1.msra.mxu0 %v149
    %259 = vmatprep.subr.mxu0 %v152
    %260 = vmatpush1.msra.mxu0 %v151
    %261 = vmatprep.subr.mxu0 %v154
    %262 = vmatpush1.msra.mxu0 %v153
    %263 = vmatprep.subr.mxu0 %v156
    %264 = vmatpush1.msra.mxu0 %v155
    %265 = vmatprep.subr.mxu0 %v158
    %266 = vmatpush1.msra.mxu0 %v157
    %267 = vmatprep.subr.mxu0 %v160
    %268 = vmatpush1.msra.mxu0 %v159
    %269 = vmatprep.subr.mxu0 %v162
    %270 = vmatpush1.msra.mxu0 %v161
    %271 = vmatprep.subr.mxu0 %v164
    %272 = vmatpush1.msra.mxu0 %v163
    %273 = vmatprep.subr.mxu0 %v166
    %274 = vmatpush1.msra.mxu0 %v165
    %275 = vmatprep.mubr.f32.mxu0 %v48
    %276 = vmatmul.mubr.f32.gmra.mrb[0].mxu0 %v90
    %v277 = vpop.f32.mrb[0].mxu0
    %v278 = vadd.f32 %v204, %v277
    %v279 = vpop.f32.mrb[0].mxu0
    %v280 = vadd.f32 %v208, %v279
    %281 = vmatprep.mubr.f32.mxu0 %v49
    %282 = vmatmul.mubr.f32.gmra.mrb[0].mxu0 %v91
    %v283 = vpop.f32.mrb[0].mxu0
    %v284 = vadd.f32 %v204, %v283
    %v285 = vpop.f32.mrb[0].mxu0
    %v286 = vadd.f32 %v208, %v285
    %287 = vdwg.mxu0
    %288 = vmatprep.subr.mxu0 %v168
    %289 = vmatpush1.msra.mxu0 %v167
    %290 = vmatprep.subr.mxu0 %v170
    %291 = vmatpush1.msra.mxu0 %v169
    %292 = vmatprep.subr.mxu0 %v172
    %293 = vmatpush1.msra.mxu0 %v171
    %294 = vmatprep.subr.mxu0 %v174
    %295 = vmatpush1.msra.mxu0 %v173
    %296 = vmatprep.subr.mxu0 %v176
    %297 = vmatpush1.msra.mxu0 %v175
    %298 = vmatprep.subr.mxu0 %v178
    %299 = vmatpush1.msra.mxu0 %v177
    %300 = vmatprep.subr.mxu0 %v180
    %301 = vmatpush1.msra.mxu0 %v179
    %302 = vmatprep.subr.mxu0 %v182
    %303 = vmatpush1.msra.mxu0 %v181
    %304 = vmatprep.subr.mxu0 %v184
    %305 = vmatpush1.msra.mxu0 %v183
    %306 = vmatprep.subr.mxu0 %v186
    %307 = vmatpush1.msra.mxu0 %v185
    %308 = vmatprep.subr.mxu0 %v188
    %309 = vmatpush1.msra.mxu0 %v187
    %310 = vmatprep.subr.mxu0 %v190
    %311 = vmatpush1.msra.mxu0 %v189
    %312 = vmatprep.subr.mxu0 %v192
    %313 = vmatpush1.msra.mxu0 %v191
    %314 = vmatprep.subr.mxu0 %v194
    %315 = vmatpush1.msra.mxu0 %v193
    %316 = vmatprep.subr.mxu0 %v196
    %317 = vmatpush1.msra.mxu0 %v195
    %318 = vmatprep.subr.mxu0 %v198
    %319 = vmatpush1.msra.mxu0 %v197
    %320 = vmatprep.subr.mxu0 0.0
    %321 = vmatpush1.msra.mxu0 0.0
    %322 = vmatprep.subr.mxu0 0.0
    %323 = vmatpush1.msra.mxu0 0.0
    %324 = vmatprep.subr.mxu0 0.0
    %325 = vmatpush1.msra.mxu0 0.0
    %326 = vmatprep.subr.mxu0 0.0
    %327 = vmatpush1.msra.mxu0 0.0
    %328 = vmatprep.subr.mxu0 0.0
    %329 = vmatpush1.msra.mxu0 0.0
    %330 = vmatprep.subr.mxu0 0.0
    %331 = vmatpush1.msra.mxu0 0.0
    %332 = vmatprep.subr.mxu0 0.0
    %333 = vmatpush1.msra.mxu0 0.0
    %334 = vmatprep.subr.mxu0 0.0
    %335 = vmatpush1.msra.mxu0 0.0
    %336 = vmatprep.subr.mxu0 0.0
    %337 = vmatpush1.msra.mxu0 0.0
    %338 = vmatprep.subr.mxu0 0.0
    %339 = vmatpush1.msra.mxu0 0.0
    %340 = vmatprep.subr.mxu0 0.0
    %341 = vmatpush1.msra.mxu0 0.0
    %342 = vmatprep.subr.mxu0 0.0
    %343 = vmatpush1.msra.mxu0 0.0
    %344 = vmatprep.subr.mxu0 0.0
    %345 = vmatpush1.msra.mxu0 0.0
    %346 = vmatprep.subr.mxu0 0.0
    %347 = vmatpush1.msra.mxu0 0.0
    %348 = vmatprep.subr.mxu0 0.0
    %349 = vmatpush1.msra.mxu0 0.0
    %350 = vmatprep.subr.mxu0 0.0
    %351 = vmatpush1.msra.mxu0 0.0
    %352 = vmatprep.mubr.f32.mxu0 0.0
    %353 = vmatmul.mubr.f32.gmra.mrb[0].mxu0 %v101
    %v354 = vpop.f32.mrb[0].mxu0
    %v355 = vadd.f32 %v278, %v354
    %v356 = vpop.f32.mrb[0].mxu0
    %v357 = vadd.f32 %v280, %v356
    %358 = vmatprep.mubr.f32.mxu0 0.0
    %359 = vmatmul.mubr.f32.gmra.mrb[0].mxu0 %v102
    %v360 = vpop.f32.mrb[0].mxu0
    %v361 = vadd.f32 %v284, %v360
    %v362 = vpop.f32.mrb[0].mxu0
    %v363 = vadd.f32 %v286, %v362
    %364 = vdwg.mxu0
    %v365 = vmax.f32 %v355, 0.0
    %v366 = vmax.f32 %v357, 0.0
    %v367 = vmax.f32 %v361, 0.0
    %v368 = vmax.f32 %v363, 0.0
    %v369 = vrot.slane %v365, 7
    %v370 = vrot.slane %v366, 7
    %v371 = vrot.slane %v367, 7
    %v372 = vrot.slane %v368, 7
    %v373 = vsel %vm83, %v369, %v371
    %v374 = vsel %vm83, %v370, %v372
    %v375 = vsel %vm83, %v371, %v369
    %v376 = vsel %vm83, %v372, %v370
    %v377 = vsel %vm88, %v375, 0.0
    %v378 = vsel %vm88, %v376, 0.0
    %v379 = vsel %vm89, %v373, 0.0
    %v380 = vsel %vm89, %v374, 0.0
    %v381 = vrot.slane %v365, 1
    %v382 = vrot.slane %v366, 1
    %v383 = vrot.slane %v367, 1
    %v384 = vrot.slane %v368, 1
    %v385 = vsel %vm94, %v381, %v383
    %v386 = vsel %vm94, %v382, %v384
    %v387 = vsel %vm94, %v383, %v381
    %v388 = vsel %vm94, %v384, %v382
    %v389 = vsel %vm99, %v385, 0.0
    %v390 = vsel %vm99, %v386, 0.0
    %v391 = vsel %vm100, %v387, 0.0
    %v392 = vsel %vm100, %v388, 0.0
    %v393 = vld [vmem:[#allocation4] sm:$0xff]
    %v394 = vld [vmem:[#allocation4 + $0x8] sm:$0xff]
    %v395 = vld [vmem:[#allocation4 + $0x10] sm:$0xff]
    %v396 = vld [vmem:[#allocation4 + $0x18] sm:$0xff]
    %v397 = vld [vmem:[#allocation4 + $0x20] sm:$0xff]
    %v398 = vld [vmem:[#allocation4 + $0x28] sm:$0xff]
    %v399 = vld [vmem:[#allocation4 + $0x30] sm:$0xff]
    %v400 = vld [vmem:[#allocation4 + $0x38] sm:$0xff]
    %v401 = vld [vmem:[#allocation4 + $0x40] sm:$0xff]
    %v402 = vld [vmem:[#allocation4 + $0x48] sm:$0xff]
    %v403 = vld [vmem:[#allocation4 + $0x50] sm:$0xff]
    %v404 = vld [vmem:[#allocation4 + $0x58] sm:$0xff]
    %v405 = vld [vmem:[#allocation4 + $0x60] sm:$0xff]
    %v406 = vld [vmem:[#allocation4 + $0x68] sm:$0xff]
    %v407 = vld [vmem:[#allocation4 + $0x70] sm:$0xff]
    %v408 = vld [vmem:[#allocation4 + $0x78] sm:$0xff]
    %v409 = vld [vmem:[#allocation4 + $0x80] sm:$0xff]
    %v410 = vld [vmem:[#allocation4 + $0x88] sm:$0xff]
    %v411 = vld [vmem:[#allocation4 + $0x90] sm:$0xff]
    %v412 = vld [vmem:[#allocation4 + $0x98] sm:$0xff]
    %v413 = vld [vmem:[#allocation4 + $0xa0] sm:$0xff]
    %v414 = vld [vmem:[#allocation4 + $0xa8] sm:$0xff]
    %v415 = vld [vmem:[#allocation4 + $0xb0] sm:$0xff]
    %v416 = vld [vmem:[#allocation4 + $0xb8] sm:$0xff]
    %v417 = vld [vmem:[#allocation4 + $0xc0] sm:$0xff]
    %v418 = vld [vmem:[#allocation4 + $0xc8] sm:$0xff]
    %v419 = vld [vmem:[#allocation4 + $0xd0] sm:$0xff]
    %v420 = vld [vmem:[#allocation4 + $0xd8] sm:$0xff]
    %v421 = vld [vmem:[#allocation4 + $0xe0] sm:$0xff]
    %v422 = vld [vmem:[#allocation4 + $0xe8] sm:$0xff]
    %v423 = vld [vmem:[#allocation4 + $0xf0] sm:$0xff]
    %v424 = vld [vmem:[#allocation4 + $0xf8] sm:$0xff]
    %v425 = vld [vmem:[#allocation4 + $0x100] sm:$0xff]
    %v426 = vld [vmem:[#allocation4 + $0x108] sm:$0xff]
    %v427 = vld [vmem:[#allocation4 + $0x110] sm:$0xff]
    %v428 = vld [vmem:[#allocation4 + $0x118] sm:$0xff]
    %v429 = vld [vmem:[#allocation4 + $0x120] sm:$0xff]
    %v430 = vld [vmem:[#allocation4 + $0x128] sm:$0xff]
    %v431 = vld [vmem:[#allocation4 + $0x130] sm:$0xff]
    %v432 = vld [vmem:[#allocation4 + $0x138] sm:$0xff]
    %v433 = vld [vmem:[#allocation4 + $0x140] sm:$0xff]
    %v434 = vld [vmem:[#allocation4 + $0x148] sm:$0xff]
    %v435 = vld [vmem:[#allocation4 + $0x150] sm:$0xff]
    %v436 = vld [vmem:[#allocation4 + $0x158] sm:$0xff]
    %v437 = vld [vmem:[#allocation4 + $0x160] sm:$0xff]
    %v438 = vld [vmem:[#allocation4 + $0x168] sm:$0xff]
    %v439 = vld [vmem:[#allocation4 + $0x170] sm:$0xff]
    %v440 = vld [vmem:[#allocation4 + $0x178] sm:$0xff]
    %v441 = vld [vmem:[#allocation4 + $0x180] sm:$0xff]
    %v442 = vld [vmem:[#allocation4 + $0x188] sm:$0xff]
    %v443 = vld [vmem:[#allocation4 + $0x190] sm:$0xff]
    %v444 = vld [vmem:[#allocation4 + $0x198] sm:$0xff]
    %v445 = vld [vmem:[#allocation4 + $0x1a0] sm:$0xff]
    %v446 = vld [vmem:[#allocation4 + $0x1a8] sm:$0xff]
    %v447 = vld [vmem:[#allocation4 + $0x1b0] sm:$0xff]
    %v448 = vld [vmem:[#allocation4 + $0x1b8] sm:$0xff]
    %v449 = vld [vmem:[#allocation4 + $0x1c0] sm:$0xff]
    %v450 = vld [vmem:[#allocation4 + $0x1c8] sm:$0xff]
    %v451 = vld [vmem:[#allocation4 + $0x1d0] sm:$0xff]
    %v452 = vld [vmem:[#allocation4 + $0x1d8] sm:$0xff]
    %v453 = vld [vmem:[#allocation4 + $0x1e0] sm:$0xff]
    %v454 = vld [vmem:[#allocation4 + $0x1e8] sm:$0xff]
    %v455 = vld [vmem:[#allocation4 + $0x1f0] sm:$0xff]
    %v456 = vld [vmem:[#allocation4 + $0x1f8] sm:$0xff]
    %v457 = vld [vmem:[#allocation4 + $0x200] sm:$0xff]
    %v458 = vld [vmem:[#allocation4 + $0x208] sm:$0xff]
    %v459 = vld [vmem:[#allocation4 + $0x210] sm:$0xff]
    %v460 = vld [vmem:[#allocation4 + $0x218] sm:$0xff]
    %v461 = vld [vmem:[#allocation4 + $0x220] sm:$0xff]
    %v462 = vld [vmem:[#allocation4 + $0x228] sm:$0xff]
    %v463 = vld [vmem:[#allocation4 + $0x230] sm:$0xff]
    %v464 = vld [vmem:[#allocation4 + $0x238] sm:$0xff]
    %v465 = vld [vmem:[#allocation4 + $0x240] sm:$0xff]
    %v466 = vld [vmem:[#allocation4 + $0x248] sm:$0xff]
    %v467 = vld [vmem:[#allocation4 + $0x250] sm:$0xff]
    %v468 = vld [vmem:[#allocation4 + $0x258] sm:$0xff]
    %v469 = vld [vmem:[#allocation4 + $0x260] sm:$0xff]
    %v470 = vld [vmem:[#allocation4 + $0x268] sm:$0xff]
    %v471 = vld [vmem:[#allocation4 + $0x270] sm:$0xff]
    %v472 = vld [vmem:[#allocation4 + $0x278] sm:$0xff]
    %v473 = vld [vmem:[#allocation4 + $0x280] sm:$0xff]
    %v474 = vld [vmem:[#allocation4 + $0x288] sm:$0xff]
    %v475 = vld [vmem:[#allocation4 + $0x290] sm:$0xff]
    %v476 = vld [vmem:[#allocation4 + $0x298] sm:$0xff]
    %v477 = vld [vmem:[#allocation4 + $0x2a0] sm:$0xff]
    %v478 = vld [vmem:[#allocation4 + $0x2a8] sm:$0xff]
    %v479 = vld [vmem:[#allocation4 + $0x2b0] sm:$0xff]
    %v480 = vld [vmem:[#allocation4 + $0x2b8] sm:$0xff]
    %v481 = vld [vmem:[#allocation4 + $0x2c0] sm:$0xff]
    %v482 = vld [vmem:[#allocation4 + $0x2c8] sm:$0xff]
    %v483 = vld [vmem:[#allocation4 + $0x2d0] sm:$0xff]
    %v484 = vld [vmem:[#allocation4 + $0x2d8] sm:$0xff]
    %v485 = vld [vmem:[#allocation4 + $0x2e0] sm:$0xff]
    %v486 = vld [vmem:[#allocation4 + $0x2e8] sm:$0xff]
    %v487 = vld [vmem:[#allocation4 + $0x2f0] sm:$0xff]
    %v488 = vld [vmem:[#allocation4 + $0x2f8] sm:$0xff]
    %v489 = vld [vmem:[%s4] sm:$0x1]
    %v491 = vlaneseq
    %v492 = vshrl.u32 %v491, 7
    %v493 = vsub.s32 0, %v492
    %v494 = vrot.slane %v489, %v493
    %496 = vmatprep.subr.mxu0 0.0
    %497 = vmatpush1.msra.mxu0 %v393
    %498 = vmatprep.subr.mxu0 0.0
    %499 = vmatpush1.msra.mxu0 %v394
    %500 = vmatprep.subr.mxu0 0.0
    %501 = vmatpush1.msra.mxu0 %v395
    %502 = vmatprep.subr.mxu0 0.0
    %503 = vmatpush1.msra.mxu0 %v396
    %504 = vmatprep.subr.mxu0 0.0
    %505 = vmatpush1.msra.mxu0 %v397
    %506 = vmatprep.subr.mxu0 0.0
    %507 = vmatpush1.msra.mxu0 %v398
    %508 = vmatprep.subr.mxu0 0.0
    %509 = vmatpush1.msra.mxu0 %v399
    %510 = vmatprep.subr.mxu0 0.0
    %511 = vmatpush1.msra.mxu0 %v400
    %512 = vmatprep.subr.mxu0 0.0
    %513 = vmatpush1.msra.mxu0 %v401
    %514 = vmatprep.subr.mxu0 0.0
    %515 = vmatpush1.msra.mxu0 %v402
    %516 = vmatprep.subr.mxu0 0.0
    %517 = vmatpush1.msra.mxu0 %v403
    %518 = vmatprep.subr.mxu0 0.0
    %519 = vmatpush1.msra.mxu0 %v404
    %520 = vmatprep.subr.mxu0 0.0
    %521 = vmatpush1.msra.mxu0 %v405
    %522 = vmatprep.subr.mxu0 0.0
    %523 = vmatpush1.msra.mxu0 %v406
    %524 = vmatprep.subr.mxu0 0.0
    %525 = vmatpush1.msra.mxu0 %v407
    %526 = vmatprep.subr.mxu0 0.0
    %527 = vmatpush1.msra.mxu0 %v408
    %528 = vmatprep.subr.mxu0 0.0
    %529 = vmatpush1.msra.mxu0 %v409
    %530 = vmatprep.subr.mxu0 0.0
    %531 = vmatpush1.msra.mxu0 %v410
    %532 = vmatprep.subr.mxu0 0.0
    %533 = vmatpush1.msra.mxu0 %v411
    %534 = vmatprep.subr.mxu0 0.0
    %535 = vmatpush1.msra.mxu0 %v412
    %536 = vmatprep.subr.mxu0 0.0
    %537 = vmatpush1.msra.mxu0 %v413
    %538 = vmatprep.subr.mxu0 0.0
    %539 = vmatpush1.msra.mxu0 %v414
    %540 = vmatprep.subr.mxu0 0.0
    %541 = vmatpush1.msra.mxu0 %v415
    %542 = vmatprep.subr.mxu0 0.0
    %543 = vmatpush1.msra.mxu0 %v416
    %544 = vmatprep.subr.mxu0 0.0
    %545 = vmatpush1.msra.mxu0 %v417
    %546 = vmatprep.subr.mxu0 0.0
    %547 = vmatpush1.msra.mxu0 %v418
    %548 = vmatprep.subr.mxu0 0.0
    %549 = vmatpush1.msra.mxu0 %v419
    %550 = vmatprep.subr.mxu0 0.0
    %551 = vmatpush1.msra.mxu0 %v420
    %552 = vmatprep.subr.mxu0 0.0
    %553 = vmatpush1.msra.mxu0 %v421
    %554 = vmatprep.subr.mxu0 0.0
    %555 = vmatpush1.msra.mxu0 %v422
    %556 = vmatprep.subr.mxu0 0.0
    %557 = vmatpush1.msra.mxu0 %v423
    %558 = vmatprep.subr.mxu0 0.0
    %559 = vmatpush1.msra.mxu0 %v424
    %560 = vmatprep.mubr.f32.mxu0 %v378
    %561 = vmatmul.mubr.f32.gmra.mrb[0].mxu0 %v377
    %v562 = vpop.f32.mrb[0].mxu0
    %v563 = vadd.f32 %v494, %v562
    %v564 = vpop.f32.mrb[0].mxu0
    %565 = vmatprep.mubr.f32.mxu0 %v380
    %566 = vmatmul.mubr.f32.gmra.mrb[0].mxu0 %v379
    %v567 = vpop.f32.mrb[0].mxu0
    %v568 = vadd.f32 %v494, %v567
    %v569 = vpop.f32.mrb[0].mxu0
    %570 = vdwg.mxu0
    %571 = vmatprep.subr.mxu0 0.0
    %572 = vmatpush1.msra.mxu0 %v425
    %573 = vmatprep.subr.mxu0 0.0
    %574 = vmatpush1.msra.mxu0 %v426
    %575 = vmatprep.subr.mxu0 0.0
    %576 = vmatpush1.msra.mxu0 %v427
    %577 = vmatprep.subr.mxu0 0.0
    %578 = vmatpush1.msra.mxu0 %v428
    %579 = vmatprep.subr.mxu0 0.0
    %580 = vmatpush1.msra.mxu0 %v429
    %581 = vmatprep.subr.mxu0 0.0
    %582 = vmatpush1.msra.mxu0 %v430
    %583 = vmatprep.subr.mxu0 0.0
    %584 = vmatpush1.msra.mxu0 %v431
    %585 = vmatprep.subr.mxu0 0.0
    %586 = vmatpush1.msra.mxu0 %v432
    %587 = vmatprep.subr.mxu0 0.0
    %588 = vmatpush1.msra.mxu0 %v433
    %589 = vmatprep.subr.mxu0 0.0
    %590 = vmatpush1.msra.mxu0 %v434
    %591 = vmatprep.subr.mxu0 0.0
    %592 = vmatpush1.msra.mxu0 %v435
    %593 = vmatprep.subr.mxu0 0.0
    %594 = vmatpush1.msra.mxu0 %v436
    %595 = vmatprep.subr.mxu0 0.0
    %596 = vmatpush1.msra.mxu0 %v437
    %597 = vmatprep.subr.mxu0 0.0
    %598 = vmatpush1.msra.mxu0 %v438
    %599 = vmatprep.subr.mxu0 0.0
    %600 = vmatpush1.msra.mxu0 %v439
    %601 = vmatprep.subr.mxu0 0.0
    %602 = vmatpush1.msra.mxu0 %v440
    %603 = vmatprep.subr.mxu0 0.0
    %604 = vmatpush1.msra.mxu0 %v441
    %605 = vmatprep.subr.mxu0 0.0
    %606 = vmatpush1.msra.mxu0 %v442
    %607 = vmatprep.subr.mxu0 0.0
    %608 = vmatpush1.msra.mxu0 %v443
    %609 = vmatprep.subr.mxu0 0.0
    %610 = vmatpush1.msra.mxu0 %v444
    %611 = vmatprep.subr.mxu0 0.0
    %612 = vmatpush1.msra.mxu0 %v445
    %613 = vmatprep.subr.mxu0 0.0
    %614 = vmatpush1.msra.mxu0 %v446
    %615 = vmatprep.subr.mxu0 0.0
    %616 = vmatpush1.msra.mxu0 %v447
    %617 = vmatprep.subr.mxu0 0.0
    %618 = vmatpush1.msra.mxu0 %v448
    %619 = vmatprep.subr.mxu0 0.0
    %620 = vmatpush1.msra.mxu0 %v449
    %621 = vmatprep.subr.mxu0 0.0
    %622 = vmatpush1.msra.mxu0 %v450
    %623 = vmatprep.subr.mxu0 0.0
    %624 = vmatpush1.msra.mxu0 %v451
    %625 = vmatprep.subr.mxu0 0.0
    %626 = vmatpush1.msra.mxu0 %v452
    %627 = vmatprep.subr.mxu0 0.0
    %628 = vmatpush1.msra.mxu0 %v453
    %629 = vmatprep.subr.mxu0 0.0
    %630 = vmatpush1.msra.mxu0 %v454
    %631 = vmatprep.subr.mxu0 0.0
    %632 = vmatpush1.msra.mxu0 %v455
    %633 = vmatprep.subr.mxu0 0.0
    %634 = vmatpush1.msra.mxu0 %v456
    %635 = vmatprep.mubr.f32.mxu0 %v366
    %636 = vmatmul.mubr.f32.gmra.mrb[0].mxu0 %v365
    %v637 = vpop.f32.mrb[0].mxu0
    %v638 = vadd.f32 %v563, %v637
    %v639 = vpop.f32.mrb[0].mxu0
    %640 = vmatprep.mubr.f32.mxu0 %v368
    %641 = vmatmul.mubr.f32.gmra.mrb[0].mxu0 %v367
    %v642 = vpop.f32.mrb[0].mxu0
    %v643 = vadd.f32 %v568, %v642
    %v644 = vpop.f32.mrb[0].mxu0
    %645 = vdwg.mxu0
    %646 = vmatprep.subr.mxu0 0.0
    %647 = vmatpush1.msra.mxu0 %v457
    %648 = vmatprep.subr.mxu0 0.0
    %649 = vmatpush1.msra.mxu0 %v458
    %650 = vmatprep.subr.mxu0 0.0
    %651 = vmatpush1.msra.mxu0 %v459
    %652 = vmatprep.subr.mxu0 0.0
    %653 = vmatpush1.msra.mxu0 %v460
    %654 = vmatprep.subr.mxu0 0.0
    %655 = vmatpush1.msra.mxu0 %v461
    %656 = vmatprep.subr.mxu0 0.0
    %657 = vmatpush1.msra.mxu0 %v462
    %658 = vmatprep.subr.mxu0 0.0
    %659 = vmatpush1.msra.mxu0 %v463
    %660 = vmatprep.subr.mxu0 0.0
    %661 = vmatpush1.msra.mxu0 %v464
    %662 = vmatprep.subr.mxu0 0.0
    %663 = vmatpush1.msra.mxu0 %v465
    %664 = vmatprep.subr.mxu0 0.0
    %665 = vmatpush1.msra.mxu0 %v466
    %666 = vmatprep.subr.mxu0 0.0
    %667 = vmatpush1.msra.mxu0 %v467
    %668 = vmatprep.subr.mxu0 0.0
    %669 = vmatpush1.msra.mxu0 %v468
    %670 = vmatprep.subr.mxu0 0.0
    %671 = vmatpush1.msra.mxu0 %v469
    %672 = vmatprep.subr.mxu0 0.0
    %673 = vmatpush1.msra.mxu0 %v470
    %674 = vmatprep.subr.mxu0 0.0
    %675 = vmatpush1.msra.mxu0 %v471
    %676 = vmatprep.subr.mxu0 0.0
    %677 = vmatpush1.msra.mxu0 %v472
    %678 = vmatprep.subr.mxu0 0.0
    %679 = vmatpush1.msra.mxu0 %v473
    %680 = vmatprep.subr.mxu0 0.0
    %681 = vmatpush1.msra.mxu0 %v474
    %682 = vmatprep.subr.mxu0 0.0
    %683 = vmatpush1.msra.mxu0 %v475
    %684 = vmatprep.subr.mxu0 0.0
    %685 = vmatpush1.msra.mxu0 %v476
    %686 = vmatprep.subr.mxu0 0.0
    %687 = vmatpush1.msra.mxu0 %v477
    %688 = vmatprep.subr.mxu0 0.0
    %689 = vmatpush1.msra.mxu0 %v478
    %690 = vmatprep.subr.mxu0 0.0
    %691 = vmatpush1.msra.mxu0 %v479
    %692 = vmatprep.subr.mxu0 0.0
    %693 = vmatpush1.msra.mxu0 %v480
    %694 = vmatprep.subr.mxu0 0.0
    %695 = vmatpush1.msra.mxu0 %v481
    %696 = vmatprep.subr.mxu0 0.0
    %697 = vmatpush1.msra.mxu0 %v482
    %698 = vmatprep.subr.mxu0 0.0
    %699 = vmatpush1.msra.mxu0 %v483
    %700 = vmatprep.subr.mxu0 0.0
    %701 = vmatpush1.msra.mxu0 %v484
    %702 = vmatprep.subr.mxu0 0.0
    %703 = vmatpush1.msra.mxu0 %v485
    %704 = vmatprep.subr.mxu0 0.0
    %705 = vmatpush1.msra.mxu0 %v486
    %706 = vmatprep.subr.mxu0 0.0
    %707 = vmatpush1.msra.mxu0 %v487
    %708 = vmatprep.subr.mxu0 0.0
    %709 = vmatpush1.msra.mxu0 %v488
    %710 = vmatprep.mubr.f32.mxu0 %v390
    %711 = vmatmul.mubr.f32.gmra.mrb[0].mxu0 %v389
    %v712 = vpop.f32.mrb[0].mxu0
    %v713 = vadd.f32 %v638, %v712
    %v714 = vpop.f32.mrb[0].mxu0
    %715 = vmatprep.mubr.f32.mxu0 %v392
    %716 = vmatmul.mubr.f32.gmra.mrb[0].mxu0 %v391
    %v717 = vpop.f32.mrb[0].mxu0
    %v718 = vadd.f32 %v643, %v717
    %v719 = vpop.f32.mrb[0].mxu0
    %720 = vdwg.mxu0
    %v721 = vadd.f32 %v713, %v48
    %v722 = vadd.f32 %v718, %v49
    %v723 = vmax.f32 %v721, 0.0
    %v724 = vmax.f32 %v722, 0.0
    %725 = vst [vmem:[%s5] sm:$0xff] %v723
    %726 = vst [vmem:[%s5 + $0x8] sm:$0xff] %v724
    // Predicated region
    $region30: #{residual_block_pallas.1} parent=1 // pred_check
      _
    $region31: #{residual_block_pallas.1} parent=1 // pred_check_branch
      %728 = sbr.rel (0) target = $region33
    $region32: #{residual_block_pallas.1} parent=1 // pred_region
      _
    $region33: #{residual_block_pallas.1} parent=1 // pred_fallthru
      _
    // Predicated region
    $region34: #{residual_block_pallas.1} parent=1 // pred_check
      _
    $region35: #{residual_block_pallas.1} parent=1 // pred_check_branch
      %730 = sbr.rel (0) target = $region37
    $region36: #{residual_block_pallas.1} parent=1 // pred_region
      _
    $region37: #{residual_block_pallas.1} parent=1 // pred_fallthru
      _
    %731 = vsyncpa [#allocation3], 1
    %732 = vsyncpa [#allocation5], 1

</llo_original>
